<compile_context>
chip_gen: v7x
topology: tpu7x:2x2x1
jax: 0.10.0
libtpu: 0.0.40
codegen_flags: <defaults>
</compile_context>

<pallas_src>
import functools

import jax
import jax.numpy as jnp
from jax.experimental import pallas as pl
from jax.experimental.pallas import tpu as pltpu


def _vmem_capacity_bytes():
    """Physical VMEM of the current chip; conservative 64 MiB fallback."""
    try:
        cap = pltpu.get_tpu_info().vmem_capacity_bytes
        if cap:
            return int(cap)
    except Exception:
        pass
    return 64 * 1024 * 1024


def _pick_tile(total, preferred, align):
    """Largest `align`-aligned divisor of `total` that is <= `preferred`.

    Falls back to the full extent only when `total` itself is <= preferred
    (small problems) or when no aligned divisor exists (ragged shapes).
    TODO(synk): pad ragged T / F to the next aligned multiple instead of
    falling back to the full extent for very large ragged dims.
    """
    if total <= preferred:
        return total
    t = (preferred // align) * align
    while t >= align:
        if total % t == 0:
            return t
        t -= align
    return total


# ---------------------------------------------------------------------------
# Kernel 1: router -- logits, softmax, top-k selection, renormalization.
# Produces dense per-(token, expert) combine weights (zero for unselected),
# kept in f32 (lane-dense (tT, E) blocks).
# ---------------------------------------------------------------------------
def _router_kernel(x_ref, wr_ref, logits_ref, cw_ref, *, topk):
    # Native-dtype operands on the MXU; f32 accumulation.
    logits = jnp.dot(x_ref[...], wr_ref[...],
                     preferred_element_type=jnp.float32)          # (tT, E)
    logits_ref[...] = logits

    # Softmax / top-k strictly in f32 (tie-break = lowest index, like torch.topk).
    probs = jax.nn.softmax(logits, axis=-1)
    T, E = probs.shape
    col = jax.lax.broadcasted_iota(jnp.int32, (T, E), 1)

    remaining = probs
    sel = jnp.zeros_like(probs)
    for _ in range(topk):                                         # small static topk
        m = jnp.max(remaining, axis=-1, keepdims=True)
        is_max = remaining >= m
        idx = jnp.min(jnp.where(is_max, col, E), axis=-1, keepdims=True)
        onehot = col == idx
        sel = sel + jnp.where(onehot, remaining, 0.0)
        remaining = jnp.where(onehot, -jnp.inf, remaining)

    if topk != 1:
        sel = sel / jnp.sum(sel, axis=-1, keepdims=True)
    cw_ref[...] = sel


# ---------------------------------------------------------------------------
# Kernel 2: experts -- grid (token tiles, experts, F tiles).
# gate / up matmuls, SiLU gating, combine weight folded into the activation,
# down-proj accumulated into a resident (tT, H) f32 accumulator.  The expert
# matmuls are skipped entirely (pl.when) when no token of this tile routes to
# this expert (scalar-prefetched mask).
# ---------------------------------------------------------------------------
def _expert_kernel(mask_ref, x_ref, cw_ref, gate_ref, up_ref, dw_ref,
                   out_ref, acc_ref, w_ref):
    t = pl.program_id(0)
    e = pl.program_id(1)
    f = pl.program_id(2)

    @pl.when(jnp.logical_and(e == 0, f == 0))
    def _():
        acc_ref[...] = jnp.zeros_like(acc_ref)

    @pl.when(mask_ref[t, e] != 0)
    def _():
        # Combine weight for expert e, extracted from the lane-dense (tT, E)
        # block once per (token tile, expert) and reused for all F tiles.
        @pl.when(f == 0)
        def _():
            col = jax.lax.broadcasted_iota(jnp.int32, cw_ref.shape, 1)
            w_ref[...] = jnp.sum(jnp.where(col == e, cw_ref[...], 0.0),
                                 axis=-1, keepdims=True)          # (tT, 1) f32

        # Native-dtype MXU matmuls with f32 accumulation.
        x = x_ref[...]
        g = jnp.dot(x, gate_ref[0], preferred_element_type=jnp.float32)  # (tT, tF)
        u = jnp.dot(x, up_ref[0], preferred_element_type=jnp.float32)    # (tT, tF)
        h = (g * jax.nn.sigmoid(g)) * u                                   # SiLU gating, f32

        # Fold w into the (tT, tF) activation before the down-proj so a single
        # f32 accumulator covers both the F and expert reductions; cast back to
        # the weight dtype so the down-proj also runs at native MXU rate.
        h = (h * w_ref[...]).astype(dw_ref.dtype)
        acc_ref[...] += jnp.dot(h, dw_ref[0], preferred_element_type=jnp.float32)

    @pl.when(jnp.logical_and(e == pl.num_programs(1) - 1,
                             f == pl.num_programs(2) - 1))
    def _():
        out_ref[...] = acc_ref[...].astype(out_ref.dtype)


# ---------------------------------------------------------------------------
# Wrapper
# ---------------------------------------------------------------------------
def moe_forward(x, w_router, gate_w, up_w, down_w, *, topk,
                token_tile=None, ffn_tile=None):
    B, S, H = x.shape
    T = B * S
    E = w_router.shape[1]
    F_dim = gate_w.shape[-1]
    assert topk <= E, "topk must not exceed the number of experts"
    x2 = x.reshape(T, H)

    # Generation-aware tiling / VMEM budget (v5e/v6e: 128 MiB, v7x: 64 MiB).
    cap = _vmem_capacity_bytes()
    vmem_limit = int(cap * 0.85)          # ~15% headroom for Mosaic scratch
    if cap >= 96 * 1024 * 1024:
        auto_tt, auto_tf = 1024, 512      # v5e / v6e: lift arithmetic intensity
    else:
        auto_tt, auto_tf = 512, 256       # v7x: smaller working set, higher BW
    token_tile = token_tile or auto_tt
    ffn_tile = ffn_tile or auto_tf

    tT = _pick_tile(T, token_tile, 8)      # sublane-aligned
    tF = _pick_tile(F_dim, ffn_tile, 128)  # lane-aligned
    nT = T // tT
    nF = F_dim // tF

    # ---- router: tiled over tokens, parallel grid ----
    logits, cw = pl.pallas_call(
        functools.partial(_router_kernel, topk=topk),
        out_shape=(jax.ShapeDtypeStruct((T, E), jnp.float32),
                   jax.ShapeDtypeStruct((T, E), jnp.float32)),
        grid_spec=pltpu.PrefetchScalarGridSpec(
            num_scalar_prefetch=0,
            grid=(nT,),
            in_specs=[pl.BlockSpec((tT, H), lambda i: (i, 0)),
                      pl.BlockSpec((H, E), lambda i: (0, 0))],
            out_specs=(pl.BlockSpec((tT, E), lambda i: (i, 0)),
                       pl.BlockSpec((tT, E), lambda i: (i, 0)))),
        compiler_params=pltpu.CompilerParams(
            dimension_semantics=("parallel",)),
    )(x2, w_router)

    # Per-(token tile, expert) routing mask: skip expert compute for tiles that
    # have no routed tokens (cheap (T, E) reduction on the host-side XLA graph).
    tile_mask = (cw.reshape(nT, tT, E) > 0.0).any(axis=1).astype(jnp.int32)

    # TODO(synk): dense weight streaming over all experts; a megablocks-style
    # grouped matmul (scalar-prefetched token-group offsets) would also skip
    # the gate/up/down weight DMA for unrouted tiles, cutting HBM traffic by
    # ~E/topk, but needs host-side token sorting.
    out = pl.pallas_call(
        _expert_kernel,
        out_shape=jax.ShapeDtypeStruct((T, H), x.dtype),
        grid_spec=pltpu.PrefetchScalarGridSpec(
            num_scalar_prefetch=1,
            grid=(nT, E, nF),
            in_specs=[pl.BlockSpec((tT, H), lambda t, e, f, m: (t, 0)),
                      pl.BlockSpec((tT, E), lambda t, e, f, m: (t, 0)),
                      pl.BlockSpec((1, H, tF), lambda t, e, f, m: (e, 0, f)),
                      pl.BlockSpec((1, H, tF), lambda t, e, f, m: (e, 0, f)),
                      pl.BlockSpec((1, tF, H), lambda t, e, f, m: (e, f, 0))],
            out_specs=pl.BlockSpec((tT, H), lambda t, e, f, m: (t, 0)),
            scratch_shapes=[pltpu.VMEM((tT, H), jnp.float32),
                            pltpu.VMEM((tT, 1), jnp.float32)]),
        compiler_params=pltpu.CompilerParams(
            dimension_semantics=("parallel", "arbitrary", "arbitrary"),
            vmem_limit_bytes=vmem_limit),
    )(tile_mask, x2, cw, gate_w, up_w, down_w)

    return out.reshape(B, S, H), logits


# ---------------------------------------------------------------------------
# Pure-JAX reference (mirrors MoE.topk_route) for validation.
# ---------------------------------------------------------------------------
def moe_reference(x, w_router, gate_w, up_w, down_w, *, topk):
    B, S, H = x.shape
    T = B * S
    E = w_router.shape[1]
    x2 = x.reshape(T, H)
    logits = x2 @ w_router
    probs = jax.nn.softmax(logits, axis=-1)
    vals, idxs = jax.lax.top_k(probs, topk)
    if topk != 1:
        vals = vals / vals.sum(axis=-1, keepdims=True)
    dense = jnp.zeros_like(probs)
    dense = dense.at[jnp.arange(T)[:, None], idxs].add(vals)

    out = jnp.zeros_like(x2)
    for e in range(E):
        g = x2 @ gate_w[e]
        u = x2 @ up_w[e]
        o = (jax.nn.silu(g) * u) @ down_w[e]
        out = out + dense[:, e:e + 1] * o
    return out.reshape(B, S, H), logits


if __name__ == "__main__":
    B, S, H, F_dim, E, topk = 2, 8, 32, 64, 4, 2

    key = jax.random.PRNGKey(0)
    kx, kr, kg, ku, kd = jax.random.split(key, 5)

    x = jax.random.normal(kx, (B, S, H), dtype=jnp.float32)

    # router: xavier_normal_ on a (E, H) torch weight -> std = sqrt(2/(H+E));
    # stored transposed as (H, E) for x @ W.
    std_r = (2.0 / (H + E)) ** 0.5
    w_router = std_r * jax.random.normal(kr, (H, E), dtype=jnp.float32)

    # NOTE: the PyTorch module deep-copies ffn_layer, so every expert would be
    # identical; we give experts distinct deterministic weights so the routing
    # path is actually exercised.
    gate_w = 0.05 * jax.random.normal(kg, (E, H, F_dim), dtype=jnp.float32)
    up_w = 0.05 * jax.random.normal(ku, (E, H, F_dim), dtype=jnp.float32)
    down_w = 0.05 * jax.random.normal(kd, (E, F_dim, H), dtype=jnp.float32)

    out, logits = moe_forward(x, w_router, gate_w, up_w, down_w, topk=topk)
    out = jax.block_until_ready(out)
    logits = jax.block_until_ready(logits)

    ref_out, ref_logits = moe_reference(x, w_router, gate_w, up_w, down_w, topk=topk)

    assert out.shape == (B, S, H) and out.dtype == x.dtype
    assert logits.shape == (B * S, E)
    assert jnp.allclose(logits, ref_logits, rtol=1e-3, atol=1e-4), "router logits mismatch"
    assert jnp.allclose(out, ref_out, rtol=5e-3, atol=1e-3), "MoE output mismatch"

    print("KERNEL_OK")
</pallas_src>

<mosaic_0001>
module attributes {stable_mosaic.version = 11 : i64} {
  func.func @_router_kernel(%arg0: i32, %arg1: memref<16x32xf32, #tpu.memory_space<vmem>>, %arg2: memref<32x4xf32, #tpu.memory_space<vmem>>, %arg3: memref<16x4xf32, #tpu.memory_space<vmem>>, %arg4: memref<16x4xf32, #tpu.memory_space<vmem>>) attributes {dimension_semantics = [#tpu.dimension_semantics<parallel>], iteration_bounds = array<i64: 1>, scalar_prefetch = 0 : i64, scratch_operands = 0 : i64, tpu.core_type = #tpu.core_type<tc>, window_params = [{transform_indices = @transform_0, window_bounds = array<i64: 16, 32>}, {pipeline_mode = #tpu.pipeline_mode<synchronous>, transform_indices = @transform_1, window_bounds = array<i64: 32, 4>}, {transform_indices = @transform_2, window_bounds = array<i64: 16, 4>}, {transform_indices = @transform_3, window_bounds = array<i64: 16, 4>}]} {
    %c0 = arith.constant 0 : index
    %c0_0 = arith.constant 0 : index
    %0 = vector.load %arg1[%c0, %c0_0] : memref<16x32xf32, #tpu.memory_space<vmem>>, vector<16x32xf32>
    %c0_1 = arith.constant 0 : index
    %c0_2 = arith.constant 0 : index
    %1 = vector.load %arg2[%c0_1, %c0_2] : memref<32x4xf32, #tpu.memory_space<vmem>>, vector<32x4xf32>
    %cst = arith.constant dense<0.000000e+00> : vector<16x4xf32>
    %2 = tpu.matmul %0, %1, %cst {dimension_numbers = #tpu.dot_dimension_numbers<[1], [0], [0], [1], [0, 0, 1, 1], [], []>} : vector<16x32xf32>, vector<32x4xf32>, vector<16x4xf32> -> vector<16x4xf32>
    %c0_3 = arith.constant 0 : index
    %c0_4 = arith.constant 0 : index
    %3 = vector.load %arg3[%c0_3, %c0_4] : memref<16x4xf32, #tpu.memory_space<vmem>>, vector<16x4xf32>
    tpu.vector_store %arg3[%c0_3, %c0_4], %2 {strides = array<i32>} : memref<16x4xf32, #tpu.memory_space<vmem>>, vector<16x4xf32>,
    %cst_5 = arith.constant dense<0xFF800000> : vector<16xf32>
    %4 = vector.multi_reduction <maximumf>, %2, %cst_5 [1] : vector<16x4xf32> to vector<16xf32>
    %cst_6 = arith.constant 0xFF800000 : f32
    %5 = vector.broadcast %cst_6 : f32 to vector<16xf32>
    %6 = arith.maximumf %5, %4 : vector<16xf32>
    %7 = vector.shape_cast %6 : vector<16xf32> to vector<16x1xf32>
    %8 = vector.broadcast %7 : vector<16x1xf32> to vector<16x4xf32>
    %9 = arith.subf %2, %8 : vector<16x4xf32>
    %10 = math.exp %9 : vector<16x4xf32>
    %cst_7 = arith.constant dense<0.000000e+00> : vector<16xf32>
    %11 = vector.multi_reduction <add>, %10, %cst_7 [1] : vector<16x4xf32> to vector<16xf32>
    %12 = vector.shape_cast %11 : vector<16xf32> to vector<16x1xf32>
    %13 = vector.broadcast %12 : vector<16x1xf32> to vector<16x4xf32>
    %14 = arith.divf %10, %13 : vector<16x4xf32>
    %15 = tpu.iota {dimensions = array<i32: 1>} : vector<16x4xi32>
    %cst_8 = arith.constant 0.000000e+00 : f32
    %16 = vector.broadcast %cst_8 : f32 to vector<16x4xf32>
    %cst_9 = arith.constant dense<0xFF800000> : vector<16xf32>
    %17 = vector.multi_reduction <maximumf>, %14, %cst_9 [1] : vector<16x4xf32> to vector<16xf32>
    %18 = vector.shape_cast %17 : vector<16xf32> to vector<16x1xf32>
    %19 = vector.broadcast %18 : vector<16x1xf32> to vector<16x4xf32>
    %20 = arith.cmpf oge, %14, %19 : vector<16x4xf32>
    %c4_i32 = arith.constant 4 : i32
    %21 = vector.broadcast %c4_i32 : i32 to vector<16x4xi32>
    %22 = arith.select %20, %15, %21 : vector<16x4xi1>, vector<16x4xi32>
    %cst_10 = arith.constant dense<2147483647> : vector<16xi32>
    %23 = vector.multi_reduction <minsi>, %22, %cst_10 [1] : vector<16x4xi32> to vector<16xi32>
    %24 = vector.shape_cast %23 : vector<16xi32> to vector<16x1xi32>
    %25 = vector.broadcast %24 : vector<16x1xi32> to vector<16x4xi32>
    %26 = arith.cmpi eq, %15, %25 : vector<16x4xi32>
    %cst_11 = arith.constant 0.000000e+00 : f32
    %27 = vector.broadcast %cst_11 : f32 to vector<16x4xf32>
    %28 = arith.select %26, %14, %27 : vector<16x4xi1>, vector<16x4xf32>
    %29 = arith.addf %16, %28 : vector<16x4xf32>
    %cst_12 = arith.constant 0xFF800000 : f32
    %30 = vector.broadcast %cst_12 : f32 to vector<16x4xf32>
    %31 = arith.select %26, %30, %14 : vector<16x4xi1>, vector<16x4xf32>
    %cst_13 = arith.constant dense<0xFF800000> : vector<16xf32>
    %32 = vector.multi_reduction <maximumf>, %31, %cst_13 [1] : vector<16x4xf32> to vector<16xf32>
    %33 = vector.shape_cast %32 : vector<16xf32> to vector<16x1xf32>
    %34 = vector.broadcast %33 : vector<16x1xf32> to vector<16x4xf32>
    %35 = arith.cmpf oge, %31, %34 : vector<16x4xf32>
    %c4_i32_14 = arith.constant 4 : i32
    %36 = vector.broadcast %c4_i32_14 : i32 to vector<16x4xi32>
    %37 = arith.select %35, %15, %36 : vector<16x4xi1>, vector<16x4xi32>
    %cst_15 = arith.constant dense<2147483647> : vector<16xi32>
    %38 = vector.multi_reduction <minsi>, %37, %cst_15 [1] : vector<16x4xi32> to vector<16xi32>
    %39 = vector.shape_cast %38 : vector<16xi32> to vector<16x1xi32>
    %40 = vector.broadcast %39 : vector<16x1xi32> to vector<16x4xi32>
    %41 = arith.cmpi eq, %15, %40 : vector<16x4xi32>
    %cst_16 = arith.constant 0.000000e+00 : f32
    %42 = vector.broadcast %cst_16 : f32 to vector<16x4xf32>
    %43 = arith.select %41, %31, %42 : vector<16x4xi1>, vector<16x4xf32>
    %44 = arith.addf %29, %43 : vector<16x4xf32>
    %cst_17 = arith.constant dense<0.000000e+00> : vector<16xf32>
    %45 = vector.multi_reduction <add>, %44, %cst_17 [1] : vector<16x4xf32> to vector<16xf32>
    %46 = vector.shape_cast %45 : vector<16xf32> to vector<16x1xf32>
    %47 = vector.broadcast %46 : vector<16x1xf32> to vector<16x4xf32>
    %48 = arith.divf %44, %47 : vector<16x4xf32>
    %c0_18 = arith.constant 0 : index
    %c0_19 = arith.constant 0 : index
    %49 = vector.load %arg4[%c0_18, %c0_19] : memref<16x4xf32, #tpu.memory_space<vmem>>, vector<16x4xf32>
    tpu.vector_store %arg4[%c0_18, %c0_19], %48 {strides = array<i32>} : memref<16x4xf32, #tpu.memory_space<vmem>>, vector<16x4xf32>,
    return
  }
  func.func @transform_0(%arg0: i32) -> (i32, i32) {
    %c0_i32 = arith.constant 0 : i32
    %c0_i32_0 = arith.constant 0 : i32
    return %arg0, %c0_i32 : i32, i32
  }
  func.func @transform_1(%arg0: i32) -> (i32, i32) {
    %c0_i32 = arith.constant 0 : i32
    %c0_i32_0 = arith.constant 0 : i32
    %c0_i32_1 = arith.constant 0 : i32
    return %c0_i32, %c0_i32_0 : i32, i32
  }
  func.func @transform_2(%arg0: i32) -> (i32, i32) {
    %c0_i32 = arith.constant 0 : i32
    %c0_i32_0 = arith.constant 0 : i32
    return %arg0, %c0_i32 : i32, i32
  }
  func.func @transform_3(%arg0: i32) -> (i32, i32) {
    %c0_i32 = arith.constant 0 : i32
    %c0_i32_0 = arith.constant 0 : i32
    return %arg0, %c0_i32 : i32, i32
  }
}

</mosaic_0001>

<llo_original>
// kernel: tpu_custom_call.1
$region0: #{tpu_custom_call.1}
  #allocation0 [shape = 'u32[]', space=smem, size = 0x4, offset = 0x4, fixed_abs, tag = 'smem constant byte address 0x4 - core index']
  #allocation1 [shape = 'u32[144,128]{1,0:T(1,128)}', space=vmem, size = 0x12000, scoped, tag = 'internal scratch']
  %s0 = inlined_call_operand.vmem [shape: f32[16,32], index: 0, kind: input, shape index: {}]
  %s1 = inlined_call_operand.vmem [shape: f32[32,4], index: 1, kind: input, shape index: {}]
  %s2 = inlined_call_operand.vmem [shape: f32[16,4], index: 2, kind: output, shape index: {0}]
  %s3 = inlined_call_operand.vmem [shape: f32[16,4], index: 3, kind: output, shape index: {1}]
  %4 = xla_tuple %s2, %s3
  %s5 = sld [smem:[#allocation0]]
  $region26: #{tpu_custom_call.1} parent=0
    _
  %s7 = ssub.s32 1, %s5
  %s8 = scalar_select 0, %s7, %s5
  // Predicated region
  $region2: #{tpu_custom_call.1} parent=0 // pred_check
    _
  $region3: #{tpu_custom_call.1} parent=0 // pred_check_branch
    %10 = sbr.rel (0) target = $region5
  $region4: #{tpu_custom_call.1} parent=0 // pred_region
    _
  $region5: #{tpu_custom_call.1} parent=0 // pred_fallthru
    _
  // Predicated region
  $region6: #{tpu_custom_call.1} parent=0 // pred_check
    _
  $region7: #{tpu_custom_call.1} parent=0 // pred_check_branch
    %12 = sbr.rel (0) target = $region9
  $region8: #{tpu_custom_call.1} parent=0 // pred_region
    _
  $region9: #{tpu_custom_call.1} parent=0 // pred_fallthru
    _
  %v13 = vld [vmem:[%s0] sm:$0xff]
  %v14 = vld [vmem:[%s0 + $0x8] sm:$0xff]
  %v15 = vld [vmem:[%s1] sm:$0xff]
  %v16 = vld [vmem:[%s1 + $0x8] sm:$0xff]
  %v17 = vld [vmem:[%s1 + $0x10] sm:$0xff]
  %v18 = vld [vmem:[%s1 + $0x18] sm:$0xff]
  %vm19 = vcmask 261120
  %v21 = vsel %vm19, %v13, 0
  %v24 = vsel %vm19, %v14, 0
  %26 = vmatprep.subr.mxu0 0.0
  %27 = vmatpush1.msra.mxu0 %v15
  %28 = vmatprep.subr.mxu0 0.0
  %29 = vmatpush1.msra.mxu0 %v16
  %30 = vmatprep.subr.mxu0 0.0
  %31 = vmatpush1.msra.mxu0 %v17
  %32 = vmatprep.subr.mxu0 0.0
  %33 = vmatpush1.msra.mxu0 %v18
  %34 = vmatprep.subr.mxu0 0.0
  %35 = vmatpush1.msra.mxu0 0.0
  %36 = vmatprep.subr.mxu0 0.0
  %37 = vmatpush1.msra.mxu0 0.0
  %38 = vmatprep.subr.mxu0 0.0
  %39 = vmatpush1.msra.mxu0 0.0
  %40 = vmatprep.subr.mxu0 0.0
  %41 = vmatpush1.msra.mxu0 0.0
  %42 = vmatprep.subr.mxu0 0.0
  %43 = vmatpush1.msra.mxu0 0.0
  %44 = vmatprep.subr.mxu0 0.0
  %45 = vmatpush1.msra.mxu0 0.0
  %46 = vmatprep.subr.mxu0 0.0
  %47 = vmatpush1.msra.mxu0 0.0
  %48 = vmatprep.subr.mxu0 0.0
  %49 = vmatpush1.msra.mxu0 0.0
  %50 = vmatprep.subr.mxu0 0.0
  %51 = vmatpush1.msra.mxu0 0.0
  %52 = vmatprep.subr.mxu0 0.0
  %53 = vmatpush1.msra.mxu0 0.0
  %54 = vmatprep.subr.mxu0 0.0
  %55 = vmatpush1.msra.mxu0 0.0
  %56 = vmatprep.subr.mxu0 0.0
  %57 = vmatpush1.msra.mxu0 0.0
  %58 = vmatprep.subr.mxu0 0.0
  %59 = vmatpush1.msra.mxu0 0.0
  %60 = vmatprep.subr.mxu0 0.0
  %61 = vmatpush1.msra.mxu0 0.0
  %62 = vmatprep.subr.mxu0 0.0
  %63 = vmatpush1.msra.mxu0 0.0
  %64 = vmatprep.subr.mxu0 0.0
  %65 = vmatpush1.msra.mxu0 0.0
  %66 = vmatprep.subr.mxu0 0.0
  %67 = vmatpush1.msra.mxu0 0.0
  %68 = vmatprep.subr.mxu0 0.0
  %69 = vmatpush1.msra.mxu0 0.0
  %70 = vmatprep.subr.mxu0 0.0
  %71 = vmatpush1.msra.mxu0 0.0
  %72 = vmatprep.subr.mxu0 0.0
  %73 = vmatpush1.msra.mxu0 0.0
  %74 = vmatprep.subr.mxu0 0.0
  %75 = vmatpush1.msra.mxu0 0.0
  %76 = vmatprep.subr.mxu0 0.0
  %77 = vmatpush1.msra.mxu0 0.0
  %78 = vmatprep.subr.mxu0 0.0
  %79 = vmatpush1.msra.mxu0 0.0
  %80 = vmatprep.subr.mxu0 0.0
  %81 = vmatpush1.msra.mxu0 0.0
  %82 = vmatprep.subr.mxu0 0.0
  %83 = vmatpush1.msra.mxu0 0.0
  %84 = vmatprep.subr.mxu0 0.0
  %85 = vmatpush1.msra.mxu0 0.0
  %86 = vmatprep.subr.mxu0 0.0
  %87 = vmatpush1.msra.mxu0 0.0
  %88 = vmatprep.subr.mxu0 0.0
  %89 = vmatpush1.msra.mxu0 0.0
  %90 = vmatprep.mubr.f32.mxu0 0.0
  %91 = vmatmul.mubr.f32.gmra.mrb[0].mxu0 %v21
  %v92 = vpop.f32.mrb[0].mxu0
  %v93 = vadd.f32 0.0, %v92
  %v94 = vpop.f32.mrb[0].mxu0
  %95 = vmatprep.mubr.f32.mxu0 0.0
  %96 = vmatmul.mubr.f32.gmra.mrb[0].mxu0 %v24
  %v97 = vpop.f32.mrb[0].mxu0
  %v98 = vadd.f32 0.0, %v97
  %v99 = vpop.f32.mrb[0].mxu0
  %100 = vdwg.mxu0
  %vm101 = vcmask 31744
  %102 = vst.msk [vmem:[%s2] sm:$0xff] %vm101, %v93
  %103 = vst.msk [vmem:[%s2 + $0x8] sm:$0xff] %vm101, %v98
  %v104 = vsel %vm101, %v93, -inf
  %105 = vmax.xlane.f32.xlu0 %v104
  %v106 = vpop.xlane.xlu0 %105
  %v107 = vsel %vm101, %v98, -inf
  %108 = vmax.xlane.f32.xlu0 %v107
  %v109 = vpop.xlane.xlu0 %108
  %v110 = vsub.f32 %v93, %v106
  %v111 = vsub.f32 %v98, %v109
  %v112 = vmul.f32 %v110, 1.442695
  %v113 = vpow.pop %v112
  %v114 = vmul.f32 %v111, 1.442695
  %v115 = vpow.pop %v114
  %v116 = vsel %vm101, %v113, 0.0
  %117 = vadd.xlane.f32.xlu0 %v116
  %v118 = vpop.xlane.xlu0 %117
  %v119 = vsel %vm101, %v115, 0.0
  %120 = vadd.xlane.f32.xlu0 %v119
  %v121 = vpop.xlane.xlu0 %120
  %v122 = vrcp.pop %v118
  %v123 = vmul.f32 %v113, %v122
  %v124 = vrcp.pop %v121
  %v125 = vmul.f32 %v115, %v124
  %v126 = vlaneseq
  %v127 = vand.u32 %v126, 127
  %v128 = vsel %vm101, %v123, -inf
  %129 = vmax.xlane.f32.xlu0 %v128
  %v130 = vpop.xlane.xlu0 %129
  %v131 = vsel %vm101, %v125, -inf
  %132 = vmax.xlane.f32.xlu0 %v131
  %v133 = vpop.xlane.xlu0 %132
  %vm134 = vcmp.ge.f32.partialorder %v123, %v130
  %vm135 = vcmp.ge.f32.partialorder %v125, %v133
  %v136 = vsel %vm134, %v127, 4
  %v137 = vsel %vm135, %v127, 4
  %v138 = vsel %vm101, %v136, 2147483647
  %v139 = vand.u32 %v138, 65535
  %v140 = vshra.s32 %v138, 16
  %v141 = vcvt.s32.f32 %v139
  %v142 = vcvt.s32.f32 %v140
  %143 = vmin.xlane.f32.xlu0 %v142
  %v144 = vpop.xlane.xlu0 %143
  %vm145 = vcmp.eq.f32.partialorder %v142, %v144
  %v146 = vsel %vm145, %v141, inf
  %147 = vmin.xlane.f32.xlu0 %v146
  %v148 = vpop.xlane.xlu0 %147
  %v149 = vcvt.f32.s32 %v148
  %v150 = vcvt.f32.s32 %v144
  %v151 = vshll.u32 %v150, 16
  %v152 = vadd.s32 %v151, %v149
  %v153 = vsel %vm101, %v137, 2147483647
  %v154 = vand.u32 %v153, 65535
  %v155 = vshra.s32 %v153, 16
  %v156 = vcvt.s32.f32 %v154
  %v157 = vcvt.s32.f32 %v155
  %158 = vmin.xlane.f32.xlu0 %v157
  %v159 = vpop.xlane.xlu0 %158
  %vm160 = vcmp.eq.f32.partialorder %v157, %v159
  %v161 = vsel %vm160, %v156, inf
  %162 = vmin.xlane.f32.xlu0 %v161
  %v163 = vpop.xlane.xlu0 %162
  %v164 = vcvt.f32.s32 %v163
  %v165 = vcvt.f32.s32 %v159
  %v166 = vshll.u32 %v165, 16
  %v167 = vadd.s32 %v166, %v164
  %vm168 = vcmp.eq.s32.totalorder %v127, %v152
  %vm169 = vcmp.eq.s32.totalorder %v127, %v167
  %v170 = vsel %vm168, %v123, 0.0
  %v171 = vsel %vm169, %v125, 0.0
  %v172 = vadd.f32 %v170, 0.0
  %v173 = vadd.f32 %v171, 0.0
  %v174 = vsel %vm168, -inf, %v123
  %v175 = vsel %vm169, -inf, %v125
  %v176 = vsel %vm101, %v174, -inf
  %177 = vmax.xlane.f32.xlu0 %v176
  %v178 = vpop.xlane.xlu0 %177
  %v179 = vsel %vm101, %v175, -inf
  %180 = vmax.xlane.f32.xlu0 %v179
  %v181 = vpop.xlane.xlu0 %180
  %vm182 = vcmp.ge.f32.partialorder %v174, %v178
  %vm183 = vcmp.ge.f32.partialorder %v175, %v181
  %v184 = vsel %vm182, %v127, 4
  %v185 = vsel %vm183, %v127, 4
  %v186 = vsel %vm101, %v184, 2147483647
  %v187 = vand.u32 %v186, 65535
  %v188 = vshra.s32 %v186, 16
  %v189 = vcvt.s32.f32 %v187
  %v190 = vcvt.s32.f32 %v188
  %191 = vmin.xlane.f32.xlu0 %v190
  %v192 = vpop.xlane.xlu0 %191
  %vm193 = vcmp.eq.f32.partialorder %v190, %v192
  %v194 = vsel %vm193, %v189, inf
  %195 = vmin.xlane.f32.xlu0 %v194
  %v196 = vpop.xlane.xlu0 %195
  %v197 = vcvt.f32.s32 %v196
  %v198 = vcvt.f32.s32 %v192
  %v199 = vshll.u32 %v198, 16
  %v200 = vadd.s32 %v199, %v197
  %v201 = vsel %vm101, %v185, 2147483647
  %v202 = vand.u32 %v201, 65535
  %v203 = vshra.s32 %v201, 16
  %v204 = vcvt.s32.f32 %v202
  %v205 = vcvt.s32.f32 %v203
  %206 = vmin.xlane.f32.xlu0 %v205
  %v207 = vpop.xlane.xlu0 %206
  %vm208 = vcmp.eq.f32.partialorder %v205, %v207
  %v209 = vsel %vm208, %v204, inf
  %210 = vmin.xlane.f32.xlu0 %v209
  %v211 = vpop.xlane.xlu0 %210
  %v212 = vcvt.f32.s32 %v211
  %v213 = vcvt.f32.s32 %v207
  %v214 = vshll.u32 %v213, 16
  %v215 = vadd.s32 %v214, %v212
  %vm216 = vcmp.eq.s32.totalorder %v127, %v200
  %vm217 = vcmp.eq.s32.totalorder %v127, %v215
  %v218 = vsel %vm216, %v174, 0.0
  %v219 = vsel %vm217, %v175, 0.0
  %v220 = vadd.f32 %v172, %v218
  %v221 = vadd.f32 %v173, %v219
  %v222 = vsel %vm101, %v220, 0.0
  %223 = vadd.xlane.f32.xlu0 %v222
  %v224 = vpop.xlane.xlu0 %223
  %v225 = vsel %vm101, %v221, 0.0
  %226 = vadd.xlane.f32.xlu0 %v225
  %v227 = vpop.xlane.xlu0 %226
  %v228 = vrcp.pop %v224
  %v229 = vmul.f32 %v220, %v228
  %v230 = vrcp.pop %v227
  %v231 = vmul.f32 %v221, %v230
  %232 = vst.msk [vmem:[%s3] sm:$0xff] %vm101, %v229
  %233 = vst.msk [vmem:[%s3 + $0x8] sm:$0xff] %vm101, %v231
  // Predicated region
  $region10: #{tpu_custom_call.1} parent=0 // pred_check
    _
  $region11: #{tpu_custom_call.1} parent=0 // pred_check_branch
    %235 = sbr.rel (0) target = $region13
  $region12: #{tpu_custom_call.1} parent=0 // pred_region
    _
  $region13: #{tpu_custom_call.1} parent=0 // pred_fallthru
    _
  // Predicated region
  $region14: #{tpu_custom_call.1} parent=0 // pred_check
    _
  $region15: #{tpu_custom_call.1} parent=0 // pred_check_branch
    %237 = sbr.rel (0) target = $region17
  $region16: #{tpu_custom_call.1} parent=0 // pred_region
    _
  $region17: #{tpu_custom_call.1} parent=0 // pred_fallthru
    _
  // Predicated region
  $region18: #{tpu_custom_call.1} parent=0 // pred_check
    _
  $region19: #{tpu_custom_call.1} parent=0 // pred_check_branch
    %239 = sbr.rel (0) target = $region21
  $region20: #{tpu_custom_call.1} parent=0 // pred_region
    _
  $region21: #{tpu_custom_call.1} parent=0 // pred_fallthru
    _
  // Predicated region
  $region22: #{tpu_custom_call.1} parent=0 // pred_check
    _
  $region23: #{tpu_custom_call.1} parent=0 // pred_check_branch
    %241 = sbr.rel (0) target = $region25
  $region24: #{tpu_custom_call.1} parent=0 // pred_region
    _
  $region25: #{tpu_custom_call.1} parent=0 // pred_fallthru
    _

</llo_original>
